<compile_context>
chip_gen: v7x
topology: tpu7x:2x2x1
jax: 0.10.0
libtpu: 0.0.40
codegen_flags: <defaults>
</compile_context>

<pallas_src>
import functools

import jax
import jax.numpy as jnp
from jax.experimental import pallas as pl
from jax.experimental.pallas import tpu as pltpu

HIDDEN = 32


def _decoder_kernel(x_ref, w1_ref, b1_ref, w2_ref, b2_ref, w3_ref, b3_ref, o_ref):
    """Fused 3-layer MLP with LeakyReLU(0.2), computed in the transposed domain.

    x_ref : [bm, z_dim]           batch rows (sublane axis = rows)
    w*    : PyTorch-native [out, in] weights; b* : [out, 1] columns
    o_ref : [channel_dim, bm]     transposed output block (lane axis = rows,
                                  so stores/activations are lane-dense).
    """
    x = x_ref[...].astype(jnp.float32)                       # [bm, z_dim]

    # Layer 1: W1 @ x^T via dot_general contracting last dims (q @ k^T pattern)
    h = jax.lax.dot_general(
        w1_ref[...], x, (((1,), (1,)), ((), ())),
        preferred_element_type=jnp.float32) + b1_ref[...]     # [32, bm]
    h = jnp.where(h > 0, h, 0.2 * h)                          # LeakyReLU(0.2)

    # Layer 2: [32, 32] @ [32, bm]
    h = jnp.dot(w2_ref[...], h, preferred_element_type=jnp.float32) + b2_ref[...]
    h = jnp.where(h > 0, h, 0.2 * h)

    # Layer 3: [channel_dim, 32] @ [32, bm], no activation
    out = jnp.dot(w3_ref[...], h, preferred_element_type=jnp.float32) + b3_ref[...]
    o_ref[...] = out.astype(o_ref.dtype)


def _round_up(a, b):
    return (a + b - 1) // b * b


@functools.partial(jax.jit, static_argnames=("z_dim", "channel_dim", "block_m"))
def decoder_forward(z, params, *, z_dim, channel_dim, block_m=2048):
    """Decoder forward pass as a single fused Pallas kernel."""
    w1, b1, w2, b2, w3, b3 = params

    x = z.reshape(-1, z_dim)          # z.view(-1, z_dim); keep caller dtype
    n = x.shape[0]
    if n == 0:
        return jnp.zeros((0, channel_dim), jnp.float32)

    # Tile selection: big tiles amortize per-step overhead; split medium N
    # into >=2 steps so both v7x TensorCores are used. The output block's lane
    # dim (bm) is a multiple of 128 unless it exactly equals the array extent.
    if n <= 256:
        bm = n
    else:
        bm = min(block_m, _round_up(pl.cdiv(n, 2), 128))
    grid = (pl.cdiv(n, bm),)          # ragged last tile handled by Pallas

    # Biases as [out, 1] columns -> broadcast along the lane (row) axis.
    b1c, b2c, b3c = b1[:, None], b2[:, None], b3[:, None]

    flops = 2 * n * (z_dim * HIDDEN + HIDDEN * HIDDEN + HIDDEN * channel_dim)
    bytes_accessed = (
        n * z_dim * x.dtype.itemsize
        + n * channel_dim * 4
        + 4 * (z_dim * HIDDEN + HIDDEN * HIDDEN + HIDDEN * channel_dim
               + 2 * HIDDEN + channel_dim))

    out_t = pl.pallas_call(
        _decoder_kernel,
        out_shape=jax.ShapeDtypeStruct((channel_dim, n), jnp.float32),
        grid_spec=pltpu.PrefetchScalarGridSpec(
            num_scalar_prefetch=0,
            grid=grid,
            in_specs=[
                pl.BlockSpec((bm, z_dim), lambda i: (i, 0)),            # x rows
                pl.BlockSpec((HIDDEN, z_dim), lambda i: (0, 0)),        # W1
                pl.BlockSpec((HIDDEN, 1), lambda i: (0, 0)),            # b1
                pl.BlockSpec((HIDDEN, HIDDEN), lambda i: (0, 0)),       # W2
                pl.BlockSpec((HIDDEN, 1), lambda i: (0, 0)),            # b2
                pl.BlockSpec((channel_dim, HIDDEN), lambda i: (0, 0)),  # W3
                pl.BlockSpec((channel_dim, 1), lambda i: (0, 0)),       # b3
            ],
            out_specs=pl.BlockSpec((channel_dim, bm), lambda i: (0, i)),
        ),
        compiler_params=pltpu.CompilerParams(
            dimension_semantics=("parallel",)),
        cost_estimate=pl.CostEstimate(
            flops=flops, transcendentals=0, bytes_accessed=bytes_accessed),
    )(x, w1, b1c, w2, b2c, w3, b3c)

    # Back to PyTorch layout [N, channel_dim]; output is only channel_dim
    # columns wide so this transpose is cheap relative to the input traffic.
    return out_t.T


def init_decoder_params(key, z_dim, channel_dim):
    """Deterministic synthetic init, PyTorch-native layouts: W [out, in], b [out]."""
    k1, k2, k3, k4, k5, k6 = jax.random.split(key, 6)

    def uniform(k, shape, fan_in):
        bound = 1.0 / jnp.sqrt(fan_in)
        return jax.random.uniform(k, shape, jnp.float32, -bound, bound)

    w1 = uniform(k1, (HIDDEN, z_dim), z_dim)
    b1 = uniform(k2, (HIDDEN,), z_dim)
    w2 = uniform(k3, (HIDDEN, HIDDEN), HIDDEN)
    b2 = uniform(k4, (HIDDEN,), HIDDEN)
    w3 = uniform(k5, (channel_dim, HIDDEN), HIDDEN)
    b3 = uniform(k6, (channel_dim,), HIDDEN)
    return (w1, b1, w2, b2, w3, b3)


def decoder_reference(z, params, z_dim):
    """Pure-JAX reference mirroring the PyTorch forward."""
    w1, b1, w2, b2, w3, b3 = params
    x = z.reshape(-1, z_dim).astype(jnp.float32)
    h = x @ w1.T + b1
    h = jnp.where(h > 0, h, 0.2 * h)
    h = h @ w2.T + b2
    h = jnp.where(h > 0, h, 0.2 * h)
    return h @ w3.T + b3


if __name__ == "__main__":
    z_dim = 8
    channel_dim = 4

    key = jax.random.PRNGKey(0)
    k_params, k_z = jax.random.split(key)

    params = init_decoder_params(k_params, z_dim, channel_dim)

    # z with arbitrary leading dims; forward flattens to (-1, z_dim).
    z = jax.random.normal(k_z, (2, 4, z_dim), dtype=jnp.float32)

    out = decoder_forward(z, params, z_dim=z_dim, channel_dim=channel_dim)
    out = jax.block_until_ready(out)

    ref = decoder_reference(z, params, z_dim)
    assert out.shape == (2 * 4, channel_dim), out.shape
    assert jnp.allclose(out, ref, atol=1e-5, rtol=1e-5), "mismatch vs reference"

    print("KERNEL_OK")
</pallas_src>

<mosaic_0001>
module attributes {stable_mosaic.version = 11 : i64} {
  func.func @_decoder_kernel(%arg0: i32, %arg1: memref<8x8xf32, #tpu.memory_space<vmem>>, %arg2: memref<32x8xf32, #tpu.memory_space<vmem>>, %arg3: memref<32x1xf32, #tpu.memory_space<vmem>>, %arg4: memref<32x32xf32, #tpu.memory_space<vmem>>, %arg5: memref<32x1xf32, #tpu.memory_space<vmem>>, %arg6: memref<4x32xf32, #tpu.memory_space<vmem>>, %arg7: memref<4x1xf32, #tpu.memory_space<vmem>>, %arg8: memref<4x8xf32, #tpu.memory_space<vmem>>) attributes {dimension_semantics = [#tpu.dimension_semantics<parallel>], iteration_bounds = array<i64: 1>, scalar_prefetch = 0 : i64, scratch_operands = 0 : i64, tpu.core_type = #tpu.core_type<tc>, window_params = [{transform_indices = @transform_0, window_bounds = array<i64: 8, 8>}, {pipeline_mode = #tpu.pipeline_mode<synchronous>, transform_indices = @transform_1, window_bounds = array<i64: 32, 8>}, {pipeline_mode = #tpu.pipeline_mode<synchronous>, transform_indices = @transform_2, window_bounds = array<i64: 32, 1>}, {pipeline_mode = #tpu.pipeline_mode<synchronous>, transform_indices = @transform_3, window_bounds = array<i64: 32, 32>}, {pipeline_mode = #tpu.pipeline_mode<synchronous>, transform_indices = @transform_4, window_bounds = array<i64: 32, 1>}, {pipeline_mode = #tpu.pipeline_mode<synchronous>, transform_indices = @transform_5, window_bounds = array<i64: 4, 32>}, {pipeline_mode = #tpu.pipeline_mode<synchronous>, transform_indices = @transform_6, window_bounds = array<i64: 4, 1>}, {transform_indices = @transform_7, window_bounds = array<i64: 4, 8>}]} {
    %c0 = arith.constant 0 : index
    %c0_0 = arith.constant 0 : index
    %0 = vector.load %arg1[%c0, %c0_0] : memref<8x8xf32, #tpu.memory_space<vmem>>, vector<8x8xf32>
    %c0_1 = arith.constant 0 : index
    %c0_2 = arith.constant 0 : index
    %1 = vector.load %arg2[%c0_1, %c0_2] : memref<32x8xf32, #tpu.memory_space<vmem>>, vector<32x8xf32>
    %cst = arith.constant dense<0.000000e+00> : vector<32x8xf32>
    %2 = tpu.matmul %1, %0, %cst {dimension_numbers = #tpu.dot_dimension_numbers<[1], [1], [0], [0], [0, 0, 1, 0], [], []>} : vector<32x8xf32>, vector<8x8xf32>, vector<32x8xf32> -> vector<32x8xf32>
    %c0_3 = arith.constant 0 : index
    %c0_4 = arith.constant 0 : index
    %3 = vector.load %arg3[%c0_3, %c0_4] : memref<32x1xf32, #tpu.memory_space<vmem>>, vector<32x1xf32>
    %4 = vector.broadcast %3 : vector<32x1xf32> to vector<32x8xf32>
    %5 = arith.addf %2, %4 : vector<32x8xf32>
    %cst_5 = arith.constant 0.000000e+00 : f32
    %6 = vector.broadcast %cst_5 : f32 to vector<32x8xf32>
    %7 = arith.cmpf ogt, %5, %6 : vector<32x8xf32>
    %cst_6 = arith.constant 2.000000e-01 : f32
    %8 = vector.broadcast %cst_6 : f32 to vector<32x8xf32>
    %9 = arith.mulf %8, %5 : vector<32x8xf32>
    %10 = arith.select %7, %5, %9 : vector<32x8xi1>, vector<32x8xf32>
    %c0_7 = arith.constant 0 : index
    %c0_8 = arith.constant 0 : index
    %11 = vector.load %arg4[%c0_7, %c0_8] : memref<32x32xf32, #tpu.memory_space<vmem>>, vector<32x32xf32>
    %cst_9 = arith.constant dense<0.000000e+00> : vector<32x8xf32>
    %12 = tpu.matmul %11, %10, %cst_9 {dimension_numbers = #tpu.dot_dimension_numbers<[1], [0], [0], [1], [0, 0, 1, 1], [], []>} : vector<32x32xf32>, vector<32x8xf32>, vector<32x8xf32> -> vector<32x8xf32>
    %c0_10 = arith.constant 0 : index
    %c0_11 = arith.constant 0 : index
    %13 = vector.load %arg5[%c0_10, %c0_11] : memref<32x1xf32, #tpu.memory_space<vmem>>, vector<32x1xf32>
    %14 = vector.broadcast %13 : vector<32x1xf32> to vector<32x8xf32>
    %15 = arith.addf %12, %14 : vector<32x8xf32>
    %cst_12 = arith.constant 0.000000e+00 : f32
    %16 = vector.broadcast %cst_12 : f32 to vector<32x8xf32>
    %17 = arith.cmpf ogt, %15, %16 : vector<32x8xf32>
    %cst_13 = arith.constant 2.000000e-01 : f32
    %18 = vector.broadcast %cst_13 : f32 to vector<32x8xf32>
    %19 = arith.mulf %18, %15 : vector<32x8xf32>
    %20 = arith.select %17, %15, %19 : vector<32x8xi1>, vector<32x8xf32>
    %c0_14 = arith.constant 0 : index
    %c0_15 = arith.constant 0 : index
    %21 = vector.load %arg6[%c0_14, %c0_15] : memref<4x32xf32, #tpu.memory_space<vmem>>, vector<4x32xf32>
    %cst_16 = arith.constant dense<0.000000e+00> : vector<4x8xf32>
    %22 = tpu.matmul %21, %20, %cst_16 {dimension_numbers = #tpu.dot_dimension_numbers<[1], [0], [0], [1], [0, 0, 1, 1], [], []>} : vector<4x32xf32>, vector<32x8xf32>, vector<4x8xf32> -> vector<4x8xf32>
    %c0_17 = arith.constant 0 : index
    %c0_18 = arith.constant 0 : index
    %23 = vector.load %arg7[%c0_17, %c0_18] : memref<4x1xf32, #tpu.memory_space<vmem>>, vector<4x1xf32>
    %24 = vector.broadcast %23 : vector<4x1xf32> to vector<4x8xf32>
    %25 = arith.addf %22, %24 : vector<4x8xf32>
    %c0_19 = arith.constant 0 : index
    %c0_20 = arith.constant 0 : index
    %26 = vector.load %arg8[%c0_19, %c0_20] : memref<4x8xf32, #tpu.memory_space<vmem>>, vector<4x8xf32>
    tpu.vector_store %arg8[%c0_19, %c0_20], %25 {strides = array<i32>} : memref<4x8xf32, #tpu.memory_space<vmem>>, vector<4x8xf32>,
    return
  }
  func.func @transform_0(%arg0: i32) -> (i32, i32) {
    %c0_i32 = arith.constant 0 : i32
    %c0_i32_0 = arith.constant 0 : i32
    return %arg0, %c0_i32 : i32, i32
  }
  func.func @transform_1(%arg0: i32) -> (i32, i32) {
    %c0_i32 = arith.constant 0 : i32
    %c0_i32_0 = arith.constant 0 : i32
    %c0_i32_1 = arith.constant 0 : i32
    return %c0_i32, %c0_i32_0 : i32, i32
  }
  func.func @transform_2(%arg0: i32) -> (i32, i32) {
    %c0_i32 = arith.constant 0 : i32
    %c0_i32_0 = arith.constant 0 : i32
    %c0_i32_1 = arith.constant 0 : i32
    return %c0_i32, %c0_i32_0 : i32, i32
  }
  func.func @transform_3(%arg0: i32) -> (i32, i32) {
    %c0_i32 = arith.constant 0 : i32
    %c0_i32_0 = arith.constant 0 : i32
    %c0_i32_1 = arith.constant 0 : i32
    return %c0_i32, %c0_i32_0 : i32, i32
  }
  func.func @transform_4(%arg0: i32) -> (i32, i32) {
    %c0_i32 = arith.constant 0 : i32
    %c0_i32_0 = arith.constant 0 : i32
    %c0_i32_1 = arith.constant 0 : i32
    return %c0_i32, %c0_i32_0 : i32, i32
  }
  func.func @transform_5(%arg0: i32) -> (i32, i32) {
    %c0_i32 = arith.constant 0 : i32
    %c0_i32_0 = arith.constant 0 : i32
    %c0_i32_1 = arith.constant 0 : i32
    return %c0_i32, %c0_i32_0 : i32, i32
  }
  func.func @transform_6(%arg0: i32) -> (i32, i32) {
    %c0_i32 = arith.constant 0 : i32
    %c0_i32_0 = arith.constant 0 : i32
    %c0_i32_1 = arith.constant 0 : i32
    return %c0_i32, %c0_i32_0 : i32, i32
  }
  func.func @transform_7(%arg0: i32) -> (i32, i32) {
    %c0_i32 = arith.constant 0 : i32
    %c0_i32_0 = arith.constant 0 : i32
    return %c0_i32, %arg0 : i32, i32
  }
}

</mosaic_0001>

<llo_original>
// kernel: decoder_forward.1
$region0: #{decoder_forward.1}
  #allocation0 [shape = 'u32[]', space=smem, size = 0x4, offset = 0x4, fixed_abs, tag = 'smem constant byte address 0x4 - core index']
  #allocation1 [shape = 'u32[144,128]{1,0:T(1,128)}', space=vmem, size = 0x12000, scoped, tag = 'internal scratch']
  %s0 = inlined_call_operand.vmem [shape: f32[8,8], index: 0, kind: input, shape index: {}]
  %s1 = inlined_call_operand.vmem [shape: f32[32,8], index: 1, kind: input, shape index: {}]
  %s2 = inlined_call_operand.vmem [shape: f32[32,1], index: 2, kind: input, shape index: {}]
  %s3 = inlined_call_operand.vmem [shape: f32[32,32], index: 3, kind: input, shape index: {}]
  %s4 = inlined_call_operand.vmem [shape: f32[32,1], index: 4, kind: input, shape index: {}]
  %s5 = inlined_call_operand.vmem [shape: f32[4,32], index: 5, kind: input, shape index: {}]
  %s6 = inlined_call_operand.vmem [shape: f32[4,1], index: 6, kind: input, shape index: {}]
  %s7 = inlined_call_operand.hbm [shape: f32[4,8], index: 7, kind: output, shape index: {}]
  %s8 = sld [smem:[#allocation0]]
  $region38: #{decoder_forward.1} parent=0
    _
  %s10 = ssub.s32 1, %s8
  %s11 = scalar_select 0, %s10, %s8
  $region1: #{decoder_forward.1} parent=0
    #allocation2 [shape = 'u8[2048]{0}', space=vmem, size = 0x800, scoped, tag = 'output window, operand 0, single buffered']
    #allocation3 [shape = 's32[1]{0}', space=sflag, size = 0x4, scoped, tag = 'scoped memory for decoder_forward.1']
    %12 = vsyncpa [#allocation3], 0
    // Predicated region
    $region2: #{decoder_forward.1} parent=1 // pred_check
      _
    $region3: #{decoder_forward.1} parent=1 // pred_check_branch
      %14 = sbr.rel (0) target = $region5
    $region4: #{decoder_forward.1} parent=1 // pred_region
      _
    $region5: #{decoder_forward.1} parent=1 // pred_fallthru
      _
    // Predicated region
    $region6: #{decoder_forward.1} parent=1 // pred_check
      _
    $region7: #{decoder_forward.1} parent=1 // pred_check_branch
      %16 = sbr.rel (0) target = $region9
    $region8: #{decoder_forward.1} parent=1 // pred_region
      _
    $region9: #{decoder_forward.1} parent=1 // pred_fallthru
      _
    // Predicated region
    $region10: #{decoder_forward.1} parent=1 // pred_check
      _
    $region11: #{decoder_forward.1} parent=1 // pred_check_branch
      %18 = sbr.rel (0) target = $region13
    $region12: #{decoder_forward.1} parent=1 // pred_region
      _
    $region13: #{decoder_forward.1} parent=1 // pred_fallthru
      _
    // Predicated region
    $region14: #{decoder_forward.1} parent=1 // pred_check
      _
    $region15: #{decoder_forward.1} parent=1 // pred_check_branch
      %20 = sbr.rel (0) target = $region17
    $region16: #{decoder_forward.1} parent=1 // pred_region
      _
    $region17: #{decoder_forward.1} parent=1 // pred_fallthru
      _
    // Predicated region
    $region18: #{decoder_forward.1} parent=1 // pred_check
      _
    $region19: #{decoder_forward.1} parent=1 // pred_check_branch
      %22 = sbr.rel (0) target = $region21
    $region20: #{decoder_forward.1} parent=1 // pred_region
      _
    $region21: #{decoder_forward.1} parent=1 // pred_fallthru
      _
    // Predicated region
    $region22: #{decoder_forward.1} parent=1 // pred_check
      _
    $region23: #{decoder_forward.1} parent=1 // pred_check_branch
      %24 = sbr.rel (0) target = $region25
    $region24: #{decoder_forward.1} parent=1 // pred_region
      _
    $region25: #{decoder_forward.1} parent=1 // pred_fallthru
      _
    // Predicated region
    $region26: #{decoder_forward.1} parent=1 // pred_check
      _
    $region27: #{decoder_forward.1} parent=1 // pred_check_branch
      %26 = sbr.rel (0) target = $region29
    $region28: #{decoder_forward.1} parent=1 // pred_region
      _
    $region29: #{decoder_forward.1} parent=1 // pred_fallthru
      _
    %v27 = vld [vmem:[%s0] sm:$0xff]
    %v28 = vld [vmem:[%s1] sm:$0xff]
    %v29 = vld [vmem:[%s1 + $0x8] sm:$0xff]
    %v30 = vld [vmem:[%s1 + $0x10] sm:$0xff]
    %v31 = vld [vmem:[%s1 + $0x18] sm:$0xff]
    %v32 = vld [vmem:[%s2] sm:$0xff]
    %v33 = vld [vmem:[%s2 + $0x8] sm:$0xff]
    %v34 = vld [vmem:[%s2 + $0x10] sm:$0xff]
    %v35 = vld [vmem:[%s2 + $0x18] sm:$0xff]
    %37 = vset.pattern.permute.xlu0 0
    %38 = vperm.xlu0 %37, %v32
    %v39 = vpop.permute.xlu0 %38
    %42 = vset.pattern.permute.xlu0 0
    %43 = vperm.xlu0 %42, %v33
    %v44 = vpop.permute.xlu0 %43
    %47 = vset.pattern.permute.xlu0 0
    %48 = vperm.xlu0 %47, %v34
    %v49 = vpop.permute.xlu0 %48
    %52 = vset.pattern.permute.xlu0 0
    %53 = vperm.xlu0 %52, %v35
    %v54 = vpop.permute.xlu0 %53
    %vm56 = vcmask 64512
    %v58 = vsel %vm56, %v28, 0
    %v61 = vsel %vm56, %v29, 0
    %v64 = vsel %vm56, %v30, 0
    %v67 = vsel %vm56, %v31, 0
    %v70 = vsel %vm56, %v27, 0
    %72 = vmatprep.subr.mxu0 0.0
    %73 = vmatpush1.xpose.msra.mxu0 %v70
    %74 = vmatprep.subr.mxu0 0.0
    %75 = vmatpush1.xpose.msra.mxu0 0.0
    %76 = vmatprep.subr.mxu0 0.0
    %77 = vmatpush1.xpose.msra.mxu0 0.0
    %78 = vmatprep.subr.mxu0 0.0
    %79 = vmatpush1.xpose.msra.mxu0 0.0
    %80 = vmatprep.subr.mxu0 0.0
    %81 = vmatpush1.xpose.msra.mxu0 0.0
    %82 = vmatprep.subr.mxu0 0.0
    %83 = vmatpush1.xpose.msra.mxu0 0.0
    %84 = vmatprep.subr.mxu0 0.0
    %85 = vmatpush1.xpose.msra.mxu0 0.0
    %86 = vmatprep.subr.mxu0 0.0
    %87 = vmatpush1.xpose.msra.mxu0 0.0
    %88 = vmatprep.subr.mxu0 0.0
    %89 = vmatpush1.xpose.msra.mxu0 0.0
    %90 = vmatprep.subr.mxu0 0.0
    %91 = vmatpush1.xpose.msra.mxu0 0.0
    %92 = vmatprep.subr.mxu0 0.0
    %93 = vmatpush1.xpose.msra.mxu0 0.0
    %94 = vmatprep.subr.mxu0 0.0
    %95 = vmatpush1.xpose.msra.mxu0 0.0
    %96 = vmatprep.subr.mxu0 0.0
    %97 = vmatpush1.xpose.msra.mxu0 0.0
    %98 = vmatprep.subr.mxu0 0.0
    %99 = vmatpush1.xpose.msra.mxu0 0.0
    %100 = vmatprep.subr.mxu0 0.0
    %101 = vmatpush1.xpose.msra.mxu0 0.0
    %102 = vmatprep.subr.mxu0 0.0
    %103 = vmatpush1.xpose.msra.mxu0 0.0
    %104 = vmatprep.subr.mxu0 0.0
    %105 = vmatpush1.xpose.msra.mxu0 0.0
    %106 = vmatprep.subr.mxu0 0.0
    %107 = vmatpush1.xpose.msra.mxu0 0.0
    %108 = vmatprep.subr.mxu0 0.0
    %109 = vmatpush1.xpose.msra.mxu0 0.0
    %110 = vmatprep.subr.mxu0 0.0
    %111 = vmatpush1.xpose.msra.mxu0 0.0
    %112 = vmatprep.subr.mxu0 0.0
    %113 = vmatpush1.xpose.msra.mxu0 0.0
    %114 = vmatprep.subr.mxu0 0.0
    %115 = vmatpush1.xpose.msra.mxu0 0.0
    %116 = vmatprep.subr.mxu0 0.0
    %117 = vmatpush1.xpose.msra.mxu0 0.0
    %118 = vmatprep.subr.mxu0 0.0
    %119 = vmatpush1.xpose.msra.mxu0 0.0
    %120 = vmatprep.subr.mxu0 0.0
    %121 = vmatpush1.xpose.msra.mxu0 0.0
    %122 = vmatprep.subr.mxu0 0.0
    %123 = vmatpush1.xpose.msra.mxu0 0.0
    %124 = vmatprep.subr.mxu0 0.0
    %125 = vmatpush1.xpose.msra.mxu0 0.0
    %126 = vmatprep.subr.mxu0 0.0
    %127 = vmatpush1.xpose.msra.mxu0 0.0
    %128 = vmatprep.subr.mxu0 0.0
    %129 = vmatpush1.xpose.msra.mxu0 0.0
    %130 = vmatprep.subr.mxu0 0.0
    %131 = vmatpush1.xpose.msra.mxu0 0.0
    %132 = vmatprep.subr.mxu0 0.0
    %133 = vmatpush1.xpose.msra.mxu0 0.0
    %134 = vmatprep.subr.mxu0 0.0
    %135 = vmatpush1.xpose.msra.mxu0 0.0
    %136 = vmatprep.mubr.f32.mxu0 0.0
    %137 = vmatmul.mubr.f32.gmra.mrb[0].mxu0 %v58
    %v138 = vpop.f32.mrb[0].mxu0
    %v139 = vadd.f32 %v39, %v138
    %v140 = vpop.f32.mrb[0].mxu0
    %141 = vmatprep.mubr.f32.mxu0 0.0
    %142 = vmatmul.mubr.f32.gmra.mrb[0].mxu0 %v61
    %v143 = vpop.f32.mrb[0].mxu0
    %v144 = vadd.f32 %v44, %v143
    %v145 = vpop.f32.mrb[0].mxu0
    %146 = vmatprep.mubr.f32.mxu0 0.0
    %147 = vmatmul.mubr.f32.gmra.mrb[0].mxu0 %v64
    %v148 = vpop.f32.mrb[0].mxu0
    %v149 = vadd.f32 %v49, %v148
    %v150 = vpop.f32.mrb[0].mxu0
    %151 = vmatprep.mubr.f32.mxu0 0.0
    %152 = vmatmul.mubr.f32.gmra.mrb[0].mxu0 %v67
    %v153 = vpop.f32.mrb[0].mxu0
    %v154 = vadd.f32 %v54, %v153
    %v155 = vpop.f32.mrb[0].mxu0
    %156 = vdwg.mxu0
    %vm157 = vcmp.gt.f32.partialorder %v139, 0.0
    %vm158 = vcmp.gt.f32.partialorder %v144, 0.0
    %vm159 = vcmp.gt.f32.partialorder %v149, 0.0
    %vm160 = vcmp.gt.f32.partialorder %v154, 0.0
    %v161 = vmul.f32 %v139, 0.2
    %v162 = vmul.f32 %v144, 0.2
    %v163 = vmul.f32 %v149, 0.2
    %v164 = vmul.f32 %v154, 0.2
    %v165 = vsel %vm157, %v139, %v161
    %v166 = vsel %vm158, %v144, %v162
    %v167 = vsel %vm159, %v149, %v163
    %v168 = vsel %vm160, %v154, %v164
    %v169 = vld [vmem:[%s3] sm:$0xff]
    %v170 = vld [vmem:[%s3 + $0x8] sm:$0xff]
    %v171 = vld [vmem:[%s3 + $0x10] sm:$0xff]
    %v172 = vld [vmem:[%s3 + $0x18] sm:$0xff]
    %v173 = vld [vmem:[%s4] sm:$0xff]
    %v174 = vld [vmem:[%s4 + $0x8] sm:$0xff]
    %v175 = vld [vmem:[%s4 + $0x10] sm:$0xff]
    %v176 = vld [vmem:[%s4 + $0x18] sm:$0xff]
    %178 = vset.pattern.permute.xlu0 0
    %179 = vperm.xlu0 %178, %v173
    %v180 = vpop.permute.xlu0 %179
    %183 = vset.pattern.permute.xlu0 0
    %184 = vperm.xlu0 %183, %v174
    %v185 = vpop.permute.xlu0 %184
    %188 = vset.pattern.permute.xlu0 0
    %189 = vperm.xlu0 %188, %v175
    %v190 = vpop.permute.xlu0 %189
    %193 = vset.pattern.permute.xlu0 0
    %194 = vperm.xlu0 %193, %v176
    %v195 = vpop.permute.xlu0 %194
    %vm197 = vcmask 261120
    %v199 = vsel %vm197, %v169, 0
    %v202 = vsel %vm197, %v170, 0
    %v205 = vsel %vm197, %v171, 0
    %v208 = vsel %vm197, %v172, 0
    %210 = vmatprep.subr.mxu0 0.0
    %211 = vmatpush1.msra.mxu0 %v165
    %212 = vmatprep.subr.mxu0 0.0
    %213 = vmatpush1.msra.mxu0 %v166
    %214 = vmatprep.subr.mxu0 0.0
    %215 = vmatpush1.msra.mxu0 %v167
    %216 = vmatprep.subr.mxu0 0.0
    %217 = vmatpush1.msra.mxu0 %v168
    %218 = vmatprep.subr.mxu0 0.0
    %219 = vmatpush1.msra.mxu0 0.0
    %220 = vmatprep.subr.mxu0 0.0
    %221 = vmatpush1.msra.mxu0 0.0
    %222 = vmatprep.subr.mxu0 0.0
    %223 = vmatpush1.msra.mxu0 0.0
    %224 = vmatprep.subr.mxu0 0.0
    %225 = vmatpush1.msra.mxu0 0.0
    %226 = vmatprep.subr.mxu0 0.0
    %227 = vmatpush1.msra.mxu0 0.0
    %228 = vmatprep.subr.mxu0 0.0
    %229 = vmatpush1.msra.mxu0 0.0
    %230 = vmatprep.subr.mxu0 0.0
    %231 = vmatpush1.msra.mxu0 0.0
    %232 = vmatprep.subr.mxu0 0.0
    %233 = vmatpush1.msra.mxu0 0.0
    %234 = vmatprep.subr.mxu0 0.0
    %235 = vmatpush1.msra.mxu0 0.0
    %236 = vmatprep.subr.mxu0 0.0
    %237 = vmatpush1.msra.mxu0 0.0
    %238 = vmatprep.subr.mxu0 0.0
    %239 = vmatpush1.msra.mxu0 0.0
    %240 = vmatprep.subr.mxu0 0.0
    %241 = vmatpush1.msra.mxu0 0.0
    %242 = vmatprep.subr.mxu0 0.0
    %243 = vmatpush1.msra.mxu0 0.0
    %244 = vmatprep.subr.mxu0 0.0
    %245 = vmatpush1.msra.mxu0 0.0
    %246 = vmatprep.subr.mxu0 0.0
    %247 = vmatpush1.msra.mxu0 0.0
    %248 = vmatprep.subr.mxu0 0.0
    %249 = vmatpush1.msra.mxu0 0.0
    %250 = vmatprep.subr.mxu0 0.0
    %251 = vmatpush1.msra.mxu0 0.0
    %252 = vmatprep.subr.mxu0 0.0
    %253 = vmatpush1.msra.mxu0 0.0
    %254 = vmatprep.subr.mxu0 0.0
    %255 = vmatpush1.msra.mxu0 0.0
    %256 = vmatprep.subr.mxu0 0.0
    %257 = vmatpush1.msra.mxu0 0.0
    %258 = vmatprep.subr.mxu0 0.0
    %259 = vmatpush1.msra.mxu0 0.0
    %260 = vmatprep.subr.mxu0 0.0
    %261 = vmatpush1.msra.mxu0 0.0
    %262 = vmatprep.subr.mxu0 0.0
    %263 = vmatpush1.msra.mxu0 0.0
    %264 = vmatprep.subr.mxu0 0.0
    %265 = vmatpush1.msra.mxu0 0.0
    %266 = vmatprep.subr.mxu0 0.0
    %267 = vmatpush1.msra.mxu0 0.0
    %268 = vmatprep.subr.mxu0 0.0
    %269 = vmatpush1.msra.mxu0 0.0
    %270 = vmatprep.subr.mxu0 0.0
    %271 = vmatpush1.msra.mxu0 0.0
    %272 = vmatprep.subr.mxu0 0.0
    %273 = vmatpush1.msra.mxu0 0.0
    %274 = vmatprep.mubr.f32.mxu0 0.0
    %275 = vmatmul.mubr.f32.gmra.mrb[0].mxu0 %v199
    %v276 = vpop.f32.mrb[0].mxu0
    %v277 = vadd.f32 %v180, %v276
    %v278 = vpop.f32.mrb[0].mxu0
    %279 = vmatprep.mubr.f32.mxu0 0.0
    %280 = vmatmul.mubr.f32.gmra.mrb[0].mxu0 %v202
    %v281 = vpop.f32.mrb[0].mxu0
    %v282 = vadd.f32 %v185, %v281
    %v283 = vpop.f32.mrb[0].mxu0
    %284 = vmatprep.mubr.f32.mxu0 0.0
    %285 = vmatmul.mubr.f32.gmra.mrb[0].mxu0 %v205
    %v286 = vpop.f32.mrb[0].mxu0
    %v287 = vadd.f32 %v190, %v286
    %v288 = vpop.f32.mrb[0].mxu0
    %289 = vmatprep.mubr.f32.mxu0 0.0
    %290 = vmatmul.mubr.f32.gmra.mrb[0].mxu0 %v208
    %v291 = vpop.f32.mrb[0].mxu0
    %v292 = vadd.f32 %v195, %v291
    %v293 = vpop.f32.mrb[0].mxu0
    %294 = vdwg.mxu0
    %vm295 = vcmp.gt.f32.partialorder %v277, 0.0
    %vm296 = vcmp.gt.f32.partialorder %v282, 0.0
    %vm297 = vcmp.gt.f32.partialorder %v287, 0.0
    %vm298 = vcmp.gt.f32.partialorder %v292, 0.0
    %v299 = vmul.f32 %v277, 0.2
    %v300 = vmul.f32 %v282, 0.2
    %v301 = vmul.f32 %v287, 0.2
    %v302 = vmul.f32 %v292, 0.2
    %v303 = vsel %vm295, %v277, %v299
    %v304 = vsel %vm296, %v282, %v300
    %v305 = vsel %vm297, %v287, %v301
    %v306 = vsel %vm298, %v292, %v302
    %v307 = vld [vmem:[%s5] sm:$0xf]
    %v308 = vld [vmem:[%s6] sm:$0xf]
    %310 = vset.pattern.permute.xlu0 0
    %311 = vperm.xlu0 %310, %v308
    %v312 = vpop.permute.xlu0 %311
    %v315 = vsel %vm197, %v307, 0
    %317 = vmatprep.subr.mxu0 0.0
    %318 = vmatpush1.msra.mxu0 %v303
    %319 = vmatprep.subr.mxu0 0.0
    %320 = vmatpush1.msra.mxu0 %v304
    %321 = vmatprep.subr.mxu0 0.0
    %322 = vmatpush1.msra.mxu0 %v305
    %323 = vmatprep.subr.mxu0 0.0
    %324 = vmatpush1.msra.mxu0 %v306
    %325 = vmatprep.subr.mxu0 0.0
    %326 = vmatpush1.msra.mxu0 0.0
    %327 = vmatprep.subr.mxu0 0.0
    %328 = vmatpush1.msra.mxu0 0.0
    %329 = vmatprep.subr.mxu0 0.0
    %330 = vmatpush1.msra.mxu0 0.0
    %331 = vmatprep.subr.mxu0 0.0
    %332 = vmatpush1.msra.mxu0 0.0
    %333 = vmatprep.subr.mxu0 0.0
    %334 = vmatpush1.msra.mxu0 0.0
    %335 = vmatprep.subr.mxu0 0.0
    %336 = vmatpush1.msra.mxu0 0.0
    %337 = vmatprep.subr.mxu0 0.0
    %338 = vmatpush1.msra.mxu0 0.0
    %339 = vmatprep.subr.mxu0 0.0
    %340 = vmatpush1.msra.mxu0 0.0
    %341 = vmatprep.subr.mxu0 0.0
    %342 = vmatpush1.msra.mxu0 0.0
    %343 = vmatprep.subr.mxu0 0.0
    %344 = vmatpush1.msra.mxu0 0.0
    %345 = vmatprep.subr.mxu0 0.0
    %346 = vmatpush1.msra.mxu0 0.0
    %347 = vmatprep.subr.mxu0 0.0
    %348 = vmatpush1.msra.mxu0 0.0
    %349 = vmatprep.subr.mxu0 0.0
    %350 = vmatpush1.msra.mxu0 0.0
    %351 = vmatprep.subr.mxu0 0.0
    %352 = vmatpush1.msra.mxu0 0.0
    %353 = vmatprep.subr.mxu0 0.0
    %354 = vmatpush1.msra.mxu0 0.0
    %355 = vmatprep.subr.mxu0 0.0
    %356 = vmatpush1.msra.mxu0 0.0
    %357 = vmatprep.subr.mxu0 0.0
    %358 = vmatpush1.msra.mxu0 0.0
    %359 = vmatprep.subr.mxu0 0.0
    %360 = vmatpush1.msra.mxu0 0.0
    %361 = vmatprep.subr.mxu0 0.0
    %362 = vmatpush1.msra.mxu0 0.0
    %363 = vmatprep.subr.mxu0 0.0
    %364 = vmatpush1.msra.mxu0 0.0
    %365 = vmatprep.subr.mxu0 0.0
    %366 = vmatpush1.msra.mxu0 0.0
    %367 = vmatprep.subr.mxu0 0.0
    %368 = vmatpush1.msra.mxu0 0.0
    %369 = vmatprep.subr.mxu0 0.0
    %370 = vmatpush1.msra.mxu0 0.0
    %371 = vmatprep.subr.mxu0 0.0
    %372 = vmatpush1.msra.mxu0 0.0
    %373 = vmatprep.subr.mxu0 0.0
    %374 = vmatpush1.msra.mxu0 0.0
    %375 = vmatprep.subr.mxu0 0.0
    %376 = vmatpush1.msra.mxu0 0.0
    %377 = vmatprep.subr.mxu0 0.0
    %378 = vmatpush1.msra.mxu0 0.0
    %379 = vmatprep.subr.mxu0 0.0
    %380 = vmatpush1.msra.mxu0 0.0
    %381 = vmatprep.mubr.f32.mxu0 0.0
    %382 = vmatmul.mubr.f32.gmra.mrb[0].mxu0 %v315
    %v383 = vpop.f32.mrb[0].mxu0
    %v384 = vadd.f32 %v312, %v383
    %v385 = vpop.f32.mrb[0].mxu0
    %386 = vdwg.mxu0
    %vm387 = vcmask 60416
    %388 = vst.msk [vmem:[#allocation2] sm:$0xf] %vm387, %v384
    // Predicated region
    $region30: #{decoder_forward.1} parent=1 // pred_check
      _
    $region31: #{decoder_forward.1} parent=1 // pred_check_branch
      %390 = sbr.rel (0) target = $region33
    $region32: #{decoder_forward.1} parent=1 // pred_region
      %s392 = ssub.s32 64, 64
      %393 = vsyncadd [#allocation3], %s392
      %s395 = sshll.u32 [#allocation2], 4
      %s396 = int_to_ptr.vmem [resolvable:$true] %s395
      %398 = dma.vmem_to_hbm [thread:$0]  %s396, 64, %s7, [#allocation3]
    $region33: #{decoder_forward.1} parent=1 // pred_fallthru
      _
    // Predicated region
    $region34: #{decoder_forward.1} parent=1 // pred_check
      _
    $region35: #{decoder_forward.1} parent=1 // pred_check_branch
      %400 = sbr.rel (0) target = $region37
    $region36: #{decoder_forward.1} parent=1 // pred_region
      %401 = dma.done [#allocation3], 64
    $region37: #{decoder_forward.1} parent=1 // pred_fallthru
      _
    %402 = vsyncpa [#allocation3], 1

</llo_original>
